<compile_context>
chip_gen: v7x
topology: tpu7x:2x2x1
jax: 0.10.0
libtpu: 0.0.40
codegen_flags: <defaults>
</compile_context>

<pallas_src>
import math

import jax
import jax.numpy as jnp
from jax.experimental import pallas as pl
from jax.experimental.pallas import tpu as pltpu

LANE = 128           # lane width (last-dim layout granularity)
SUBLANE = 8          # sublane granularity for f32 tiles
MAX_BATCH_TILE = 2048


def _round_up(n, m):
    return ((n + m - 1) // m) * m


def _pad2d(x, rows, cols):
    return jnp.pad(x, ((0, rows - x.shape[0]), (0, cols - x.shape[1])))


def actor_fwd_kernel(x_ref, w1_ref, b1_ref, w2_ref, b2_ref, w3_ref, b3_ref, out_ref):
    # x arrives f32 (feature dim unpadded); cast to bf16 in-register for the MXU.
    x = x_ref[...].astype(jnp.bfloat16)

    # Layer 1: Linear + ReLU  (bf16 operands -> f32 MXU accumulation)
    a = jnp.dot(x, w1_ref[...], preferred_element_type=jnp.float32)
    a = jnp.maximum(a + b1_ref[...], 0.0)          # f32 elementwise (v5e-safe)

    # Layer 2: Linear + ReLU
    a = jnp.dot(a.astype(jnp.bfloat16), w2_ref[...], preferred_element_type=jnp.float32)
    a = jnp.maximum(a + b2_ref[...], 0.0)

    # mu head: Linear + tanh * 2 — stored at true action_dim width.
    mu = jnp.dot(a.astype(jnp.bfloat16), w3_ref[...], preferred_element_type=jnp.float32)
    mu = jnp.tanh(mu + b3_ref[...]) * 2.0
    out_ref[...] = mu.astype(out_ref.dtype)


def prepare_actor_params(params):
    """One-time host-side prep.  Only the hidden (net_width) dim is zero-padded
    up to a multiple of 128; state_dim and action_dim stay unpadded so the
    kernel never moves dead HBM bytes for them.  Weights (MXU operands) are
    cast to bf16; biases stay f32."""
    w1, b1, w2, b2, w3, b3 = params
    D = w1.shape[0]
    A = w3.shape[1]
    Hp = _round_up(w1.shape[1], LANE)

    w1p = _pad2d(w1, D, Hp).astype(jnp.bfloat16)
    w2p = _pad2d(w2, Hp, Hp).astype(jnp.bfloat16)
    w3p = _pad2d(w3, Hp, A).astype(jnp.bfloat16)
    b1p = _pad2d(b1, 1, Hp).astype(jnp.float32)
    b2p = _pad2d(b2, 1, Hp).astype(jnp.float32)
    b3p = b3.astype(jnp.float32)
    return (w1p, b1p, w2p, b2p, w3p, b3p)


@jax.jit
def actor_forward(state, padded_params):
    """state: [B, state_dim] float32.  padded_params: output of prepare_actor_params.
    Returns mu: [B, action_dim] float32."""
    w1, b1, w2, b2, w3, b3 = padded_params
    B, D = state.shape
    Hp = w1.shape[1]
    A = w3.shape[1]

    # Batch tile: big enough to amortize per-grid-step overhead, but aim for
    # >=2 grid steps when the batch allows so v7x's 2 TensorCores both work.
    bt = min(MAX_BATCH_TILE, max(SUBLANE, _round_up((B + 1) // 2, SUBLANE)))
    grid = (pl.cdiv(B, bt),)   # partial tail block is masked by Pallas

    cost = pl.CostEstimate(
        flops=2 * B * (D * Hp + Hp * Hp + Hp * A),
        transcendentals=B * A,
        bytes_accessed=(state.size * 4
                        + (w1.size + w2.size + w3.size) * 2
                        + (b1.size + b2.size + b3.size) * 4
                        + B * A * 4),
    )

    return pl.pallas_call(
        actor_fwd_kernel,
        out_shape=jax.ShapeDtypeStruct((B, A), jnp.float32),
        grid=grid,
        in_specs=[
            pl.BlockSpec((bt, D), lambda i: (i, 0)),    # x: batch-tiled, feature dim unpadded
            pl.BlockSpec((D, Hp), lambda i: (0, 0)),    # weights/biases: resident (constant index_map)
            pl.BlockSpec((1, Hp), lambda i: (0, 0)),
            pl.BlockSpec((Hp, Hp), lambda i: (0, 0)),
            pl.BlockSpec((1, Hp), lambda i: (0, 0)),
            pl.BlockSpec((Hp, A), lambda i: (0, 0)),
            pl.BlockSpec((1, A), lambda i: (0, 0)),
        ],
        out_specs=pl.BlockSpec((bt, A), lambda i: (i, 0)),
        compiler_params=pltpu.CompilerParams(
            dimension_semantics=("parallel",),          # megacore sharding on v7x
        ),
        cost_estimate=cost,
    )(state, w1, b1, w2, b2, w3, b3)


def init_actor_params(key, state_dim, action_dim, net_width):
    """Deterministic init mirroring nn.Linear default (U[-1/sqrt(fan_in), 1/sqrt(fan_in)])
    plus the Actor-specific mu_head scaling (weight * 0.1, bias * 0)."""
    keys = jax.random.split(key, 6)

    def linear(kw, kb, fan_in, fan_out):
        bound = 1.0 / math.sqrt(fan_in)
        # stored as [in, out] (transposed relative to torch's [out, in])
        w = jax.random.uniform(kw, (fan_in, fan_out), jnp.float32, -bound, bound)
        b = jax.random.uniform(kb, (1, fan_out), jnp.float32, -bound, bound)
        return w, b

    w1, b1 = linear(keys[0], keys[1], state_dim, net_width)
    w2, b2 = linear(keys[2], keys[3], net_width, net_width)
    w3, b3 = linear(keys[4], keys[5], net_width, action_dim)
    w3 = w3 * 0.1          # self.mu_head.weight.data.mul_(0.1)
    b3 = b3 * 0.0          # self.mu_head.bias.data.mul_(0.0)
    return (w1, b1, w2, b2, w3, b3)


if __name__ == "__main__":
    # Small shapes consistent with the module; B chosen to exercise the
    # partial-tail-block path (grid of 2, last block has 4 valid rows).
    B, STATE_DIM, ACTION_DIM, NET_WIDTH = 12, 8, 4, 32

    key = jax.random.PRNGKey(0)
    k_params, k_state = jax.random.split(key)

    params = init_actor_params(k_params, STATE_DIM, ACTION_DIM, NET_WIDTH)
    state = jax.random.normal(k_state, (B, STATE_DIM), jnp.float32)

    padded_params = prepare_actor_params(params)
    mu = actor_forward(state, padded_params)
    mu = jax.block_until_ready(mu)
    assert mu.shape == (B, ACTION_DIM)

    # Reference 1: pure-JAX replica of the kernel's bf16-matmul / f32-accumulate math.
    w1, b1, w2, b2, w3, b3 = params
    xb = state.astype(jnp.bfloat16)
    a = jnp.maximum(jnp.dot(xb, w1.astype(jnp.bfloat16),
                            preferred_element_type=jnp.float32) + b1, 0.0)
    a = jnp.maximum(jnp.dot(a.astype(jnp.bfloat16), w2.astype(jnp.bfloat16),
                            preferred_element_type=jnp.float32) + b2, 0.0)
    ref_bf16 = jnp.tanh(jnp.dot(a.astype(jnp.bfloat16), w3.astype(jnp.bfloat16),
                                preferred_element_type=jnp.float32) + b3) * 2.0
    assert jnp.allclose(mu, ref_bf16, atol=1e-2, rtol=1e-2)

    # Reference 2: the original module's full-f32 math (loose tol: bf16 matmul operands
    # are an intentional precision trade; keep f32 weights if exact parity is required).
    a32 = jnp.maximum(state @ w1 + b1, 0.0)
    a32 = jnp.maximum(a32 @ w2 + b2, 0.0)
    ref_f32 = jnp.tanh(a32 @ w3 + b3) * 2.0
    assert jnp.allclose(mu, ref_f32, atol=5e-2)

    print("KERNEL_OK")
</pallas_src>

<mosaic_0001>
module attributes {stable_mosaic.version = 11 : i64} {
  func.func @actor_fwd_kernel(%arg0: i32, %arg1: memref<8x8xf32, #tpu.memory_space<vmem>>, %arg2: memref<8x128xbf16, #tpu.memory_space<vmem>>, %arg3: memref<1x128xf32, #tpu.memory_space<vmem>>, %arg4: memref<128x128xbf16, #tpu.memory_space<vmem>>, %arg5: memref<1x128xf32, #tpu.memory_space<vmem>>, %arg6: memref<128x4xbf16, #tpu.memory_space<vmem>>, %arg7: memref<1x4xf32, #tpu.memory_space<vmem>>, %arg8: memref<8x4xf32, #tpu.memory_space<vmem>>) attributes {dimension_semantics = [#tpu.dimension_semantics<parallel>], iteration_bounds = array<i64: 2>, scalar_prefetch = 0 : i64, scratch_operands = 0 : i64, tpu.core_type = #tpu.core_type<tc>, window_params = [{transform_indices = @transform_0, window_bounds = array<i64: 8, 8>}, {pipeline_mode = #tpu.pipeline_mode<synchronous>, transform_indices = @transform_1, window_bounds = array<i64: 8, 128>}, {pipeline_mode = #tpu.pipeline_mode<synchronous>, transform_indices = @transform_2, window_bounds = array<i64: 1, 128>}, {pipeline_mode = #tpu.pipeline_mode<synchronous>, transform_indices = @transform_3, window_bounds = array<i64: 128, 128>}, {pipeline_mode = #tpu.pipeline_mode<synchronous>, transform_indices = @transform_4, window_bounds = array<i64: 1, 128>}, {pipeline_mode = #tpu.pipeline_mode<synchronous>, transform_indices = @transform_5, window_bounds = array<i64: 128, 4>}, {pipeline_mode = #tpu.pipeline_mode<synchronous>, transform_indices = @transform_6, window_bounds = array<i64: 1, 4>}, {transform_indices = @transform_7, window_bounds = array<i64: 8, 4>}]} {
    %c0 = arith.constant 0 : index
    %c0_0 = arith.constant 0 : index
    %0 = vector.load %arg1[%c0, %c0_0] : memref<8x8xf32, #tpu.memory_space<vmem>>, vector<8x8xf32>
    %1 = arith.truncf %0 : vector<8x8xf32> to vector<8x8xbf16>
    %c0_1 = arith.constant 0 : index
    %c0_2 = arith.constant 0 : index
    %2 = vector.load %arg2[%c0_1, %c0_2] : memref<8x128xbf16, #tpu.memory_space<vmem>>, vector<8x128xbf16>
    %cst = arith.constant dense<0.000000e+00> : vector<8x128xf32>
    %3 = tpu.matmul %1, %2, %cst {dimension_numbers = #tpu.dot_dimension_numbers<[1], [0], [0], [1], [0, 0, 1, 1], [], []>} : vector<8x8xbf16>, vector<8x128xbf16>, vector<8x128xf32> -> vector<8x128xf32>
    %c0_3 = arith.constant 0 : index
    %c0_4 = arith.constant 0 : index
    %4 = vector.load %arg3[%c0_3, %c0_4] : memref<1x128xf32, #tpu.memory_space<vmem>>, vector<1x128xf32>
    %5 = vector.broadcast %4 : vector<1x128xf32> to vector<8x128xf32>
    %6 = arith.addf %3, %5 : vector<8x128xf32>
    %cst_5 = arith.constant 0.000000e+00 : f32
    %7 = vector.broadcast %cst_5 : f32 to vector<8x128xf32>
    %8 = arith.maximumf %6, %7 : vector<8x128xf32>
    %9 = arith.truncf %8 : vector<8x128xf32> to vector<8x128xbf16>
    %c0_6 = arith.constant 0 : index
    %c0_7 = arith.constant 0 : index
    %10 = vector.load %arg4[%c0_6, %c0_7] : memref<128x128xbf16, #tpu.memory_space<vmem>>, vector<128x128xbf16>
    %cst_8 = arith.constant dense<0.000000e+00> : vector<8x128xf32>
    %11 = tpu.matmul %9, %10, %cst_8 {dimension_numbers = #tpu.dot_dimension_numbers<[1], [0], [0], [1], [0, 0, 1, 1], [], []>} : vector<8x128xbf16>, vector<128x128xbf16>, vector<8x128xf32> -> vector<8x128xf32>
    %c0_9 = arith.constant 0 : index
    %c0_10 = arith.constant 0 : index
    %12 = vector.load %arg5[%c0_9, %c0_10] : memref<1x128xf32, #tpu.memory_space<vmem>>, vector<1x128xf32>
    %13 = vector.broadcast %12 : vector<1x128xf32> to vector<8x128xf32>
    %14 = arith.addf %11, %13 : vector<8x128xf32>
    %cst_11 = arith.constant 0.000000e+00 : f32
    %15 = vector.broadcast %cst_11 : f32 to vector<8x128xf32>
    %16 = arith.maximumf %14, %15 : vector<8x128xf32>
    %17 = arith.truncf %16 : vector<8x128xf32> to vector<8x128xbf16>
    %c0_12 = arith.constant 0 : index
    %c0_13 = arith.constant 0 : index
    %18 = vector.load %arg6[%c0_12, %c0_13] : memref<128x4xbf16, #tpu.memory_space<vmem>>, vector<128x4xbf16>
    %cst_14 = arith.constant dense<0.000000e+00> : vector<8x4xf32>
    %19 = tpu.matmul %17, %18, %cst_14 {dimension_numbers = #tpu.dot_dimension_numbers<[1], [0], [0], [1], [0, 0, 1, 1], [], []>} : vector<8x128xbf16>, vector<128x4xbf16>, vector<8x4xf32> -> vector<8x4xf32>
    %c0_15 = arith.constant 0 : index
    %c0_16 = arith.constant 0 : index
    %20 = vector.load %arg7[%c0_15, %c0_16] : memref<1x4xf32, #tpu.memory_space<vmem>>, vector<1x4xf32>
    %21 = vector.broadcast %20 : vector<1x4xf32> to vector<8x4xf32>
    %22 = arith.addf %19, %21 : vector<8x4xf32>
    %23 = math.tanh %22 : vector<8x4xf32>
    %cst_17 = arith.constant 2.000000e+00 : f32
    %24 = vector.broadcast %cst_17 : f32 to vector<8x4xf32>
    %25 = arith.mulf %23, %24 : vector<8x4xf32>
    %c0_18 = arith.constant 0 : index
    %c0_19 = arith.constant 0 : index
    %26 = vector.load %arg8[%c0_18, %c0_19] : memref<8x4xf32, #tpu.memory_space<vmem>>, vector<8x4xf32>
    tpu.vector_store %arg8[%c0_18, %c0_19], %25 {strides = array<i32>} : memref<8x4xf32, #tpu.memory_space<vmem>>, vector<8x4xf32>,
    return
  }
  func.func @transform_0(%arg0: i32) -> (i32, i32) {
    %c0_i32 = arith.constant 0 : i32
    %c0_i32_0 = arith.constant 0 : i32
    return %arg0, %c0_i32 : i32, i32
  }
  func.func @transform_1(%arg0: i32) -> (i32, i32) {
    %c0_i32 = arith.constant 0 : i32
    %c0_i32_0 = arith.constant 0 : i32
    %c0_i32_1 = arith.constant 0 : i32
    return %c0_i32, %c0_i32_0 : i32, i32
  }
  func.func @transform_2(%arg0: i32) -> (i32, i32) {
    %c0_i32 = arith.constant 0 : i32
    %c0_i32_0 = arith.constant 0 : i32
    %c0_i32_1 = arith.constant 0 : i32
    return %c0_i32, %c0_i32_0 : i32, i32
  }
  func.func @transform_3(%arg0: i32) -> (i32, i32) {
    %c0_i32 = arith.constant 0 : i32
    %c0_i32_0 = arith.constant 0 : i32
    %c0_i32_1 = arith.constant 0 : i32
    return %c0_i32, %c0_i32_0 : i32, i32
  }
  func.func @transform_4(%arg0: i32) -> (i32, i32) {
    %c0_i32 = arith.constant 0 : i32
    %c0_i32_0 = arith.constant 0 : i32
    %c0_i32_1 = arith.constant 0 : i32
    return %c0_i32, %c0_i32_0 : i32, i32
  }
  func.func @transform_5(%arg0: i32) -> (i32, i32) {
    %c0_i32 = arith.constant 0 : i32
    %c0_i32_0 = arith.constant 0 : i32
    %c0_i32_1 = arith.constant 0 : i32
    return %c0_i32, %c0_i32_0 : i32, i32
  }
  func.func @transform_6(%arg0: i32) -> (i32, i32) {
    %c0_i32 = arith.constant 0 : i32
    %c0_i32_0 = arith.constant 0 : i32
    %c0_i32_1 = arith.constant 0 : i32
    return %c0_i32, %c0_i32_0 : i32, i32
  }
  func.func @transform_7(%arg0: i32) -> (i32, i32) {
    %c0_i32 = arith.constant 0 : i32
    %c0_i32_0 = arith.constant 0 : i32
    return %arg0, %c0_i32 : i32, i32
  }
}

</mosaic_0001>

<llo_original>
// kernel: actor_forward.1
$region0: #{actor_forward.1}
  #allocation0 [shape = 'u32[]', space=smem, size = 0x4, offset = 0x4, fixed_abs, tag = 'smem constant byte address 0x4 - core index']
  #allocation1 [shape = 'u32[144,128]{1,0:T(1,128)}', space=vmem, size = 0x12000, scoped, tag = 'internal scratch']
  %s0 = inlined_call_operand.vmem [shape: f32[12,8], index: 0, kind: input, shape index: {}]
  %s1 = inlined_call_operand.vmem [shape: bf16[8,128], index: 1, kind: input, shape index: {}]
  %s2 = inlined_call_operand.vmem [shape: f32[1,128], index: 2, kind: input, shape index: {}]
  %s3 = inlined_call_operand.vmem [shape: bf16[128,128], index: 3, kind: input, shape index: {}]
  %s4 = inlined_call_operand.vmem [shape: f32[1,128], index: 4, kind: input, shape index: {}]
  %s5 = inlined_call_operand.vmem [shape: bf16[128,4], index: 5, kind: input, shape index: {}]
  %s6 = inlined_call_operand.vmem [shape: f32[1,4], index: 6, kind: input, shape index: {}]
  %s7 = inlined_call_operand.vmem [shape: f32[12,4], index: 7, kind: output, shape index: {}]
  %s8 = sld [smem:[#allocation0]]
  $region61: #{actor_forward.1} parent=0
    _
  %s10 = ssub.s32 1, %s8
  %s11 = scalar_select 0, %s10, %s8
  loop: start=0, step=1, limit=4
  $region2: #{actor_forward.1} parent=0 // loop_pre_header
    _
  $region3: #{actor_forward.1} parent=0 // loop_header
    %s13 = sphi 0, %s17
    %p14 = scmp.ge.s32.totalorder %s13, 4
    %s23 = sphi 0, %s25
    %s26 = sphi 0, %s23
    %s27 = sphi 0, %s26
    %s43 = sphi 0, %s27
    %s47 = sphi 0, %s47
    %s49 = sphi 0, %s47
    %s50 = sphi 0, %s49
    %s64 = sphi 0, %s50
    %s68 = sphi 0, %s68
    %s70 = sphi 0, %s68
    %s71 = sphi 0, %s70
    %s85 = sphi 0, %s71
    %s89 = sphi 0, %s89
    %s91 = sphi 0, %s89
    %s92 = sphi 0, %s91
    %s106 = sphi 0, %s92
    %s110 = sphi 0, %s110
    %s112 = sphi 0, %s110
    %s113 = sphi 0, %s112
    %s127 = sphi 0, %s113
    %s131 = sphi 0, %s131
    %s133 = sphi 0, %s131
    %s134 = sphi 0, %s133
    %s148 = sphi 0, %s134
    %s152 = sphi 0, %s152
    %s154 = sphi 0, %s152
    %s155 = sphi 0, %s154
    %s169 = sphi 0, %s155
    %s175 = sphi 0, %s177
    %s178 = sphi 0, %s175
    %s179 = sphi 0, %s178
    %s195 = sphi 0, %s179
  $region4: #{actor_forward.1} parent=0 // loop_header_branch
    %16 = sbr.rel (%p14) target = $region8
  $region5: #{actor_forward.1} parent=0 // loop_body
    %s18 = ssub.s32 %s13, 1
    %s19 = ssub.s32 %s13, 2
    %s20 = sadd.s32 %s13, 1
    %s21 = ssub.s32 %s13, %s20
    %p22 = scmp.eq.s32.totalorder %s21, 0
    %s24 = sadd.s32 %s23, 1
    %s25 = scalar_select %p22, %s23, %s24
    %p28 = pneg %p22
    %p29 = scmp.eq.s32.totalorder %s13, 1
    %p30 = por %p28, %p29
    %p31 = scmp.ne.s32.totalorder %s23, %s26
    %p32 = scmp.eq.s32.totalorder %s13, 0
    %p33 = por %p31, %p32
    %p34 = scmp.ne.s32.totalorder %s23, %s26
    %p35 = scmp.eq.s32.totalorder %s18, 1
    %p36 = por %p34, %p35
    %p37 = scmp.ne.s32.totalorder %s26, %s27
    %p38 = scmp.eq.s32.totalorder %s18, 0
    %p39 = por %p37, %p38
    %p40 = scmp.ne.s32.totalorder %s26, %s27
    %p41 = scmp.eq.s32.totalorder %s19, 1
    %p42 = por %p40, %p41
    %p44 = scmp.ne.s32.totalorder %s27, %s43
    %p45 = scmp.eq.s32.totalorder %s19, 0
    %p46 = por %p44, %p45
    %s48 = sadd.s32 %s47, 1
    %p51 = scmp.eq.s32.totalorder %s13, 1
    %p52 = scmp.ne.s32.totalorder %s47, %s49
    %p53 = scmp.eq.s32.totalorder %s13, 0
    %p54 = por %p52, %p53
    %p55 = scmp.ne.s32.totalorder %s47, %s49
    %p56 = scmp.eq.s32.totalorder %s18, 1
    %p57 = por %p55, %p56
    %p58 = scmp.ne.s32.totalorder %s49, %s50
    %p59 = scmp.eq.s32.totalorder %s18, 0
    %p60 = por %p58, %p59
    %p61 = scmp.ne.s32.totalorder %s49, %s50
    %p62 = scmp.eq.s32.totalorder %s19, 1
    %p63 = por %p61, %p62
    %p65 = scmp.ne.s32.totalorder %s50, %s64
    %p66 = scmp.eq.s32.totalorder %s19, 0
    %p67 = por %p65, %p66
    %s69 = sadd.s32 %s68, 1
    %p72 = scmp.eq.s32.totalorder %s13, 1
    %p73 = scmp.ne.s32.totalorder %s68, %s70
    %p74 = scmp.eq.s32.totalorder %s13, 0
    %p75 = por %p73, %p74
    %p76 = scmp.ne.s32.totalorder %s68, %s70
    %p77 = scmp.eq.s32.totalorder %s18, 1
    %p78 = por %p76, %p77
    %p79 = scmp.ne.s32.totalorder %s70, %s71
    %p80 = scmp.eq.s32.totalorder %s18, 0
    %p81 = por %p79, %p80
    %p82 = scmp.ne.s32.totalorder %s70, %s71
    %p83 = scmp.eq.s32.totalorder %s19, 1
    %p84 = por %p82, %p83
    %p86 = scmp.ne.s32.totalorder %s71, %s85
    %p87 = scmp.eq.s32.totalorder %s19, 0
    %p88 = por %p86, %p87
    %s90 = sadd.s32 %s89, 1
    %p93 = scmp.eq.s32.totalorder %s13, 1
    %p94 = scmp.ne.s32.totalorder %s89, %s91
    %p95 = scmp.eq.s32.totalorder %s13, 0
    %p96 = por %p94, %p95
    %p97 = scmp.ne.s32.totalorder %s89, %s91
    %p98 = scmp.eq.s32.totalorder %s18, 1
    %p99 = por %p97, %p98
    %p100 = scmp.ne.s32.totalorder %s91, %s92
    %p101 = scmp.eq.s32.totalorder %s18, 0
    %p102 = por %p100, %p101
    %p103 = scmp.ne.s32.totalorder %s91, %s92
    %p104 = scmp.eq.s32.totalorder %s19, 1
    %p105 = por %p103, %p104
    %p107 = scmp.ne.s32.totalorder %s92, %s106
    %p108 = scmp.eq.s32.totalorder %s19, 0
    %p109 = por %p107, %p108
    %s111 = sadd.s32 %s110, 1
    %p114 = scmp.eq.s32.totalorder %s13, 1
    %p115 = scmp.ne.s32.totalorder %s110, %s112
    %p116 = scmp.eq.s32.totalorder %s13, 0
    %p117 = por %p115, %p116
    %p118 = scmp.ne.s32.totalorder %s110, %s112
    %p119 = scmp.eq.s32.totalorder %s18, 1
    %p120 = por %p118, %p119
    %p121 = scmp.ne.s32.totalorder %s112, %s113
    %p122 = scmp.eq.s32.totalorder %s18, 0
    %p123 = por %p121, %p122
    %p124 = scmp.ne.s32.totalorder %s112, %s113
    %p125 = scmp.eq.s32.totalorder %s19, 1
    %p126 = por %p124, %p125
    %p128 = scmp.ne.s32.totalorder %s113, %s127
    %p129 = scmp.eq.s32.totalorder %s19, 0
    %p130 = por %p128, %p129
    %s132 = sadd.s32 %s131, 1
    %p135 = scmp.eq.s32.totalorder %s13, 1
    %p136 = scmp.ne.s32.totalorder %s131, %s133
    %p137 = scmp.eq.s32.totalorder %s13, 0
    %p138 = por %p136, %p137
    %p139 = scmp.ne.s32.totalorder %s131, %s133
    %p140 = scmp.eq.s32.totalorder %s18, 1
    %p141 = por %p139, %p140
    %p142 = scmp.ne.s32.totalorder %s133, %s134
    %p143 = scmp.eq.s32.totalorder %s18, 0
    %p144 = por %p142, %p143
    %p145 = scmp.ne.s32.totalorder %s133, %s134
    %p146 = scmp.eq.s32.totalorder %s19, 1
    %p147 = por %p145, %p146
    %p149 = scmp.ne.s32.totalorder %s134, %s148
    %p150 = scmp.eq.s32.totalorder %s19, 0
    %p151 = por %p149, %p150
    %s153 = sadd.s32 %s152, 1
    %p156 = scmp.eq.s32.totalorder %s13, 1
    %p157 = scmp.ne.s32.totalorder %s152, %s154
    %p158 = scmp.eq.s32.totalorder %s13, 0
    %p159 = por %p157, %p158
    %p160 = scmp.ne.s32.totalorder %s152, %s154
    %p161 = scmp.eq.s32.totalorder %s18, 1
    %p162 = por %p160, %p161
    %p163 = scmp.ne.s32.totalorder %s154, %s155
    %p164 = scmp.eq.s32.totalorder %s18, 0
    %p165 = por %p163, %p164
    %p166 = scmp.ne.s32.totalorder %s154, %s155
    %p167 = scmp.eq.s32.totalorder %s19, 1
    %p168 = por %p166, %p167
    %p170 = scmp.ne.s32.totalorder %s155, %s169
    %p171 = scmp.eq.s32.totalorder %s19, 0
    %p172 = por %p170, %p171
    %s173 = ssub.s32 %s13, %s20
    %p174 = scmp.eq.s32.totalorder %s173, 0
    %s176 = sadd.s32 %s175, 1
    %s177 = scalar_select %p174, %s175, %s176
    %p180 = pneg %p174
    %p181 = scmp.eq.s32.totalorder %s13, 1
    %p182 = por %p180, %p181
    %p183 = scmp.ne.s32.totalorder %s175, %s178
    %p184 = scmp.eq.s32.totalorder %s13, 0
    %p185 = por %p183, %p184
    %p186 = scmp.ne.s32.totalorder %s175, %s178
    %p187 = scmp.eq.s32.totalorder %s18, 1
    %p188 = por %p186, %p187
    %p189 = scmp.ne.s32.totalorder %s178, %s179
    %p190 = scmp.eq.s32.totalorder %s18, 0
    %p191 = por %p189, %p190
    %p192 = scmp.ne.s32.totalorder %s178, %s179
    %p193 = scmp.eq.s32.totalorder %s19, 1
    %p194 = por %p192, %p193
    %p196 = scmp.ne.s32.totalorder %s179, %s195
    %p197 = scmp.eq.s32.totalorder %s19, 0
    %p198 = por %p196, %p197
    %p199 = scmp.le.s32.totalorder 1, %s13
    %p200 = scmp.lt.s32.totalorder %s13, 3
    %p201 = pnand %p199, %p200
    %p202 = pneg %p201
    // Predicated region
    $region9: #{actor_forward.1} parent=5 // pred_check
      _
    $region10: #{actor_forward.1} parent=5 // pred_check_branch
      %204 = sbr.rel (%p201) target = $region12
    $region11: #{actor_forward.1} parent=5 // pred_region
      %s205 = ssub.s32 %s13, 1
      // Predicated region
      $region13: #{actor_forward.1} parent=11 // pred_check
        %p206 = pneg %p60
      $region14: #{actor_forward.1} parent=11 // pred_check_branch
        %208 = sbr.rel (%p206) target = $region16
      $region15: #{actor_forward.1} parent=11 // pred_region
        _
      $region16: #{actor_forward.1} parent=11 // pred_fallthru
        _
      // Predicated region
      $region17: #{actor_forward.1} parent=11 // pred_check
        %p209 = pneg %p81
      $region18: #{actor_forward.1} parent=11 // pred_check_branch
        %211 = sbr.rel (%p209) target = $region20
      $region19: #{actor_forward.1} parent=11 // pred_region
        _
      $region20: #{actor_forward.1} parent=11 // pred_fallthru
        _
      // Predicated region
      $region21: #{actor_forward.1} parent=11 // pred_check
        %p212 = pneg %p102
      $region22: #{actor_forward.1} parent=11 // pred_check_branch
        %214 = sbr.rel (%p212) target = $region24
      $region23: #{actor_forward.1} parent=11 // pred_region
        _
      $region24: #{actor_forward.1} parent=11 // pred_fallthru
        _
      // Predicated region
      $region25: #{actor_forward.1} parent=11 // pred_check
        %p215 = pneg %p123
      $region26: #{actor_forward.1} parent=11 // pred_check_branch
        %217 = sbr.rel (%p215) target = $region28
      $region27: #{actor_forward.1} parent=11 // pred_region
        _
      $region28: #{actor_forward.1} parent=11 // pred_fallthru
        _
      // Predicated region
      $region29: #{actor_forward.1} parent=11 // pred_check
        %p218 = pneg %p144
      $region30: #{actor_forward.1} parent=11 // pred_check_branch
        %220 = sbr.rel (%p218) target = $region32
      $region31: #{actor_forward.1} parent=11 // pred_region
        _
      $region32: #{actor_forward.1} parent=11 // pred_fallthru
        _
      // Predicated region
      $region33: #{actor_forward.1} parent=11 // pred_check
        %p221 = pneg %p165
      $region34: #{actor_forward.1} parent=11 // pred_check_branch
        %223 = sbr.rel (%p221) target = $region36
      $region35: #{actor_forward.1} parent=11 // pred_region
        _
      $region36: #{actor_forward.1} parent=11 // pred_fallthru
        _
    $region12: #{actor_forward.1} parent=5 // pred_fallthru
      _
    %p224 = scmp.lt.s32.totalorder %s13, 2
    // Predicated region
    $region37: #{actor_forward.1} parent=5 // pred_check
      %p225 = pneg %p224
    $region38: #{actor_forward.1} parent=5 // pred_check_branch
      %227 = sbr.rel (%p225) target = $region40
    $region39: #{actor_forward.1} parent=5 // pred_region
      // Predicated region
      $region41: #{actor_forward.1} parent=39 // pred_check
        %p228 = pneg %p33
      $region42: #{actor_forward.1} parent=39 // pred_check_branch
        %230 = sbr.rel (%p228) target = $region44
      $region43: #{actor_forward.1} parent=39 // pred_region
        %p231 = scmp.lt.s32.totalorder %s13, 1
        %s232 = scalar_select %p231, %s13, 1
        %s233 = smul.addr %s232, 8
        %s234 = scalar_lea.vmem %s0, %s233
      $region44: #{actor_forward.1} parent=39 // pred_fallthru
        _
    $region40: #{actor_forward.1} parent=5 // pred_fallthru
      _
    %p235 = scmp.le.s32.totalorder 1, %s13
    %p236 = scmp.lt.s32.totalorder %s13, 3
    %p237 = pnand %p235, %p236
    %p238 = pneg %p237
    // Predicated region
    $region45: #{actor_forward.1} parent=5 // pred_check
      _
    $region46: #{actor_forward.1} parent=5 // pred_check_branch
      %240 = sbr.rel (%p237) target = $region48
    $region47: #{actor_forward.1} parent=5 // pred_region
      %s241 = ssub.s32 %s13, 1
      %p242 = scmp.lt.s32.totalorder %s18, 1
      %s243 = scalar_select %p242, %s18, 1
      %s244 = smul.addr %s243, 8
      %s245 = scalar_lea.vmem %s0, %s244
      %p246 = pneg %p39
      %p247 = pneg %p36
      %p248 = pneg %p60
      %p249 = pneg %p57
      %p250 = pneg %p81
      %p251 = pneg %p78
      %p252 = pneg %p102
      %p253 = pneg %p99
      %p254 = pneg %p123
      %p255 = pneg %p120
      %p256 = pneg %p144
      %p257 = pneg %p141
      %p258 = pneg %p165
      %p259 = pneg %p162
      %p260 = pneg %p191
      %p261 = pneg %p188
      %p262 = scmp.lt.s32.totalorder %s18, 1
      %s263 = scalar_select %p262, %s18, 1
      %s264 = smul.addr %s263, 8
      %s265 = scalar_lea.vmem %s7, %s264
      %p266 = scmp.lt.s32.totalorder %s18, 1
      %s267 = scalar_select %p266, %s18, 1
      %s268 = smul.addr %s267, 8
      %s269 = scalar_lea.vmem %s0, %s268
      %p270 = scmp.lt.s32.totalorder %s18, 1
      %s271 = scalar_select %p270, %s18, 1
      %s272 = smul.addr %s271, 8
      %s273 = scalar_lea.vmem %s7, %s272
      %v275 = vld [vmem:[%s269] sm:$0xff]
      %v276 = vpack.c.bf16 %v275, %v275
      %v277 = vld [vmem:[%s1] sm:$0xf]
      %v278 = vld [vmem:[%s2] sm:$0x1]
      %v280 = vlaneseq
      %v281 = vshrl.u32 %v280, 7
      %v282 = vsub.s32 0, %v281
      %v283 = vrot.slane %v278, %v282
      %vm285 = vcmask 64512
      %v287 = vsel %vm285, %v276, 0
      %vm289 = vcmask 1043456
      %v291 = vsel %vm289, %v277, 0
      %293 = vmatprep.subr.bf16.mxu0 0
      %294 = vmatpush1.bf16.msra.mxu0 %v291
      %295 = vmatprep.subr.bf16.mxu0 0
      %296 = vmatpush1.bf16.msra.mxu0 0
      %297 = vmatprep.subr.bf16.mxu0 0
      %298 = vmatpush1.bf16.msra.mxu0 0
      %299 = vmatprep.subr.bf16.mxu0 0
      %300 = vmatpush1.bf16.msra.mxu0 0
      %301 = vmatprep.subr.bf16.mxu0 0
      %302 = vmatpush1.bf16.msra.mxu0 0
      %303 = vmatprep.subr.bf16.mxu0 0
      %304 = vmatpush1.bf16.msra.mxu0 0
      %305 = vmatprep.subr.bf16.mxu0 0
      %306 = vmatpush1.bf16.msra.mxu0 0
      %307 = vmatprep.subr.bf16.mxu0 0
      %308 = vmatpush1.bf16.msra.mxu0 0
      %309 = vmatprep.subr.bf16.mxu0 0
      %310 = vmatpush1.bf16.msra.mxu0 0
      %311 = vmatprep.subr.bf16.mxu0 0
      %312 = vmatpush1.bf16.msra.mxu0 0
      %313 = vmatprep.subr.bf16.mxu0 0
      %314 = vmatpush1.bf16.msra.mxu0 0
      %315 = vmatprep.subr.bf16.mxu0 0
      %316 = vmatpush1.bf16.msra.mxu0 0
      %317 = vmatprep.subr.bf16.mxu0 0
      %318 = vmatpush1.bf16.msra.mxu0 0
      %319 = vmatprep.subr.bf16.mxu0 0
      %320 = vmatpush1.bf16.msra.mxu0 0
      %321 = vmatprep.subr.bf16.mxu0 0
      %322 = vmatpush1.bf16.msra.mxu0 0
      %323 = vmatprep.subr.bf16.mxu0 0
      %324 = vmatpush1.bf16.msra.mxu0 0
      %325 = vmatprep.mubr.bf16.mxu0 0
      %326 = vmatmul.mubr.bf16.gmra.mrb[0].mxu0 %v287
      %v327 = vpop.f32.mrb[0].mxu0
      %v328 = vadd.f32 %v283, %v327
      %v329 = vpop.f32.mrb[0].mxu0
      %v330 = vpop.f32.mrb[0].mxu0
      %v331 = vpop.f32.mrb[0].mxu0
      %332 = vdwg.mxu0
      %v333 = vmax.f32 %v328, 0.0
      %v334 = vpack.c.bf16 %v333, %v333
      %v335 = vld [vmem:[%s3] sm:$0xf]
      %v336 = vld [vmem:[%s3 + $0x4] sm:$0xf]
      %v337 = vld [vmem:[%s3 + $0x8] sm:$0xf]
      %v338 = vld [vmem:[%s3 + $0xc] sm:$0xf]
      %v339 = vld [vmem:[%s3 + $0x10] sm:$0xf]
      %v340 = vld [vmem:[%s3 + $0x14] sm:$0xf]
      %v341 = vld [vmem:[%s3 + $0x18] sm:$0xf]
      %v342 = vld [vmem:[%s3 + $0x1c] sm:$0xf]
      %v343 = vld [vmem:[%s3 + $0x20] sm:$0xf]
      %v344 = vld [vmem:[%s3 + $0x24] sm:$0xf]
      %v345 = vld [vmem:[%s3 + $0x28] sm:$0xf]
      %v346 = vld [vmem:[%s3 + $0x2c] sm:$0xf]
      %v347 = vld [vmem:[%s3 + $0x30] sm:$0xf]
      %v348 = vld [vmem:[%s3 + $0x34] sm:$0xf]
      %v349 = vld [vmem:[%s3 + $0x38] sm:$0xf]
      %v350 = vld [vmem:[%s3 + $0x3c] sm:$0xf]
      %v351 = vld [vmem:[%s4] sm:$0x1]
      %v353 = vlaneseq
      %v354 = vshrl.u32 %v353, 7
      %v355 = vsub.s32 0, %v354
      %v356 = vrot.slane %v351, %v355
      %v374 = vunpack.c.l.b16 %v335
      %v375 = vunpack.c.l.b16 %v336
      %v376 = vunpack.c.l.b16 %v337
      %v377 = vunpack.c.l.b16 %v338
      %v378 = vunpack.c.l.b16 %v339
      %v379 = vunpack.c.l.b16 %v340
      %v380 = vunpack.c.l.b16 %v341
      %v381 = vunpack.c.l.b16 %v342
      %v382 = vunpack.c.l.b16 %v343
      %v383 = vunpack.c.l.b16 %v344
      %v384 = vunpack.c.l.b16 %v345
      %v385 = vunpack.c.l.b16 %v346
      %v386 = vunpack.c.l.b16 %v347
      %v387 = vunpack.c.l.b16 %v348
      %v388 = vunpack.c.l.b16 %v349
      %v389 = vunpack.c.l.b16 %v350
      %v390 = vpack.c.b16 %v375, %v374
      %v391 = vpack.c.b16 %v377, %v376
      %v392 = vpack.c.b16 %v379, %v378
      %v393 = vpack.c.b16 %v381, %v380
      %v394 = vpack.c.b16 %v383, %v382
      %v395 = vpack.c.b16 %v385, %v384
      %v396 = vpack.c.b16 %v387, %v386
      %v397 = vpack.c.b16 %v389, %v388
      %406 = vmatprep.subr.bf16.mxu0 0
      %407 = vmatpush1.bf16.msra.mxu0 %v390
      %408 = vmatprep.subr.bf16.mxu0 0
      %409 = vmatpush1.bf16.msra.mxu0 %v391
      %410 = vmatprep.subr.bf16.mxu0 0
      %411 = vmatpush1.bf16.msra.mxu0 %v392
      %412 = vmatprep.subr.bf16.mxu0 0
      %413 = vmatpush1.bf16.msra.mxu0 %v393
      %414 = vmatprep.subr.bf16.mxu0 0
      %415 = vmatpush1.bf16.msra.mxu0 %v394
      %416 = vmatprep.subr.bf16.mxu0 0
      %417 = vmatpush1.bf16.msra.mxu0 %v395
      %418 = vmatprep.subr.bf16.mxu0 0
      %419 = vmatpush1.bf16.msra.mxu0 %v396
      %420 = vmatprep.subr.bf16.mxu0 0
      %421 = vmatpush1.bf16.msra.mxu0 %v397
      %422 = vmatprep.subr.bf16.mxu0 0
      %423 = vmatpush1.bf16.msra.mxu0 0
      %424 = vmatprep.subr.bf16.mxu0 0
      %425 = vmatpush1.bf16.msra.mxu0 0
      %426 = vmatprep.subr.bf16.mxu0 0
      %427 = vmatpush1.bf16.msra.mxu0 0
      %428 = vmatprep.subr.bf16.mxu0 0
      %429 = vmatpush1.bf16.msra.mxu0 0
      %430 = vmatprep.subr.bf16.mxu0 0
      %431 = vmatpush1.bf16.msra.mxu0 0
      %432 = vmatprep.subr.bf16.mxu0 0
      %433 = vmatpush1.bf16.msra.mxu0 0
      %434 = vmatprep.subr.bf16.mxu0 0
      %435 = vmatpush1.bf16.msra.mxu0 0
      %436 = vmatprep.subr.bf16.mxu0 0
      %437 = vmatpush1.bf16.msra.mxu0 0
      %438 = vmatprep.mubr.bf16.mxu0 0
      %439 = vmatmul.mubr.bf16.gmra.mrb[0].mxu0 %v334
      %v440 = vpop.f32.mrb[0].mxu0
      %v441 = vadd.f32 %v356, %v440
      %v442 = vpop.f32.mrb[0].mxu0
      %v443 = vpop.f32.mrb[0].mxu0
      %v444 = vpop.f32.mrb[0].mxu0
      %445 = vdwg.mxu0
      %v446 = vmax.f32 %v441, 0.0
      %v447 = vpack.c.bf16 %v446, %v446
      %v448 = vld [vmem:[%s5] sm:$0xf]
      %v449 = vld [vmem:[%s5 + $0x4] sm:$0xf]
      %v450 = vld [vmem:[%s5 + $0x8] sm:$0xf]
      %v451 = vld [vmem:[%s5 + $0xc] sm:$0xf]
      %v452 = vld [vmem:[%s5 + $0x10] sm:$0xf]
      %v453 = vld [vmem:[%s5 + $0x14] sm:$0xf]
      %v454 = vld [vmem:[%s5 + $0x18] sm:$0xf]
      %v455 = vld [vmem:[%s5 + $0x1c] sm:$0xf]
      %v456 = vld [vmem:[%s5 + $0x20] sm:$0xf]
      %v457 = vld [vmem:[%s5 + $0x24] sm:$0xf]
      %v458 = vld [vmem:[%s5 + $0x28] sm:$0xf]
      %v459 = vld [vmem:[%s5 + $0x2c] sm:$0xf]
      %v460 = vld [vmem:[%s5 + $0x30] sm:$0xf]
      %v461 = vld [vmem:[%s5 + $0x34] sm:$0xf]
      %v462 = vld [vmem:[%s5 + $0x38] sm:$0xf]
      %v463 = vld [vmem:[%s5 + $0x3c] sm:$0xf]
      %v464 = vld [vmem:[%s6] sm:$0x1]
      %v466 = vlaneseq
      %v467 = vshrl.u32 %v466, 7
      %v468 = vsub.s32 0, %v467
      %v469 = vrot.slane %v464, %v468
      %v487 = vunpack.c.l.b16 %v448
      %v488 = vunpack.c.l.b16 %v449
      %v489 = vunpack.c.l.b16 %v450
      %v490 = vunpack.c.l.b16 %v451
      %v491 = vunpack.c.l.b16 %v452
      %v492 = vunpack.c.l.b16 %v453
      %v493 = vunpack.c.l.b16 %v454
      %v494 = vunpack.c.l.b16 %v455
      %v495 = vunpack.c.l.b16 %v456
      %v496 = vunpack.c.l.b16 %v457
      %v497 = vunpack.c.l.b16 %v458
      %v498 = vunpack.c.l.b16 %v459
      %v499 = vunpack.c.l.b16 %v460
      %v500 = vunpack.c.l.b16 %v461
      %v501 = vunpack.c.l.b16 %v462
      %v502 = vunpack.c.l.b16 %v463
      %v503 = vpack.c.b16 %v488, %v487
      %v504 = vpack.c.b16 %v490, %v489
      %v505 = vpack.c.b16 %v492, %v491
      %v506 = vpack.c.b16 %v494, %v493
      %v507 = vpack.c.b16 %v496, %v495
      %v508 = vpack.c.b16 %v498, %v497
      %v509 = vpack.c.b16 %v500, %v499
      %v510 = vpack.c.b16 %v502, %v501
      %519 = vmatprep.subr.bf16.mxu0 0
      %520 = vmatpush1.bf16.msra.mxu0 %v503
      %521 = vmatprep.subr.bf16.mxu0 0
      %522 = vmatpush1.bf16.msra.mxu0 %v504
      %523 = vmatprep.subr.bf16.mxu0 0
      %524 = vmatpush1.bf16.msra.mxu0 %v505
      %525 = vmatprep.subr.bf16.mxu0 0
      %526 = vmatpush1.bf16.msra.mxu0 %v506
      %527 = vmatprep.subr.bf16.mxu0 0
      %528 = vmatpush1.bf16.msra.mxu0 %v507
      %529 = vmatprep.subr.bf16.mxu0 0
      %530 = vmatpush1.bf16.msra.mxu0 %v508
      %531 = vmatprep.subr.bf16.mxu0 0
      %532 = vmatpush1.bf16.msra.mxu0 %v509
      %533 = vmatprep.subr.bf16.mxu0 0
      %534 = vmatpush1.bf16.msra.mxu0 %v510
      %535 = vmatprep.subr.bf16.mxu0 0
      %536 = vmatpush1.bf16.msra.mxu0 0
      %537 = vmatprep.subr.bf16.mxu0 0
      %538 = vmatpush1.bf16.msra.mxu0 0
      %539 = vmatprep.subr.bf16.mxu0 0
      %540 = vmatpush1.bf16.msra.mxu0 0
      %541 = vmatprep.subr.bf16.mxu0 0
      %542 = vmatpush1.bf16.msra.mxu0 0
      %543 = vmatprep.subr.bf16.mxu0 0
      %544 = vmatpush1.bf16.msra.mxu0 0
      %545 = vmatprep.subr.bf16.mxu0 0
      %546 = vmatpush1.bf16.msra.mxu0 0
      %547 = vmatprep.subr.bf16.mxu0 0
      %548 = vmatpush1.bf16.msra.mxu0 0
      %549 = vmatprep.subr.bf16.mxu0 0
      %550 = vmatpush1.bf16.msra.mxu0 0
      %551 = vmatprep.mubr.bf16.mxu0 0
      %552 = vmatmul.mubr.bf16.gmra.mrb[0].mxu0 %v447
      %v553 = vpop.f32.mrb[0].mxu0
      %v554 = vadd.f32 %v469, %v553
      %v555 = vpop.f32.mrb[0].mxu0
      %v556 = vpop.f32.mrb[0].mxu0
      %v557 = vpop.f32.mrb[0].mxu0
      %558 = vdwg.mxu0
      %v559 = vtanh.pop %v554
      %v560 = vmul.f32 %v559, 2.0
      %vm561 = vcmask 31744
      %562 = vst.msk [vmem:[%s273] sm:$0xff] %vm561, %v560
      %p563 = scmp.lt.s32.totalorder %s18, 1
      %s564 = scalar_select %p563, %s18, 1
      %s565 = smul.addr %s564, 8
      %s566 = scalar_lea.vmem %s7, %s565
      // Predicated region
      $region49: #{actor_forward.1} parent=47 // pred_check
        %p567 = pneg %p188
      $region50: #{actor_forward.1} parent=47 // pred_check_branch
        %569 = sbr.rel (%p567) target = $region52
      $region51: #{actor_forward.1} parent=47 // pred_region
        _
      $region52: #{actor_forward.1} parent=47 // pred_fallthru
        _
    $region48: #{actor_forward.1} parent=5 // pred_fallthru
      _
    %p570 = scmp.le.s32.totalorder 2, %s13
    // Predicated region
    $region53: #{actor_forward.1} parent=5 // pred_check
      %p571 = pneg %p570
    $region54: #{actor_forward.1} parent=5 // pred_check_branch
      %573 = sbr.rel (%p571) target = $region56
    $region55: #{actor_forward.1} parent=5 // pred_region
      %s574 = ssub.s32 %s13, 2
      // Predicated region
      $region57: #{actor_forward.1} parent=55 // pred_check
        %p575 = pneg %p194
      $region58: #{actor_forward.1} parent=55 // pred_check_branch
        %577 = sbr.rel (%p575) target = $region60
      $region59: #{actor_forward.1} parent=55 // pred_region
        %p578 = scmp.lt.s32.totalorder %s19, 1
        %s579 = scalar_select %p578, %s19, 1
        %s580 = smul.addr %s579, 8
        %s581 = scalar_lea.vmem %s7, %s580
      $region60: #{actor_forward.1} parent=55 // pred_fallthru
        _
    $region56: #{actor_forward.1} parent=5 // pred_fallthru
      _
  $region6: #{actor_forward.1} parent=0 // loop_footer
    %s17 = sadd.s32 1, %s13
  $region7: #{actor_forward.1} parent=0 // loop_footer_branch
    %12 = sbr.rel target = $region3
  $region8: #{actor_forward.1} parent=0 // loop_exit
    _

</llo_original>
